<compile_context>
chip_gen: v7x
topology: tpu7x:2x2x1
jax: 0.10.0
libtpu: 0.0.40
codegen_flags: <defaults>
</compile_context>

<pallas_src>
import functools

import jax
import jax.numpy as jnp
from jax import lax
from jax.experimental import pallas as pl
from jax.experimental.pallas import tpu as pltpu


_VMEM = pl.BlockSpec(memory_space=pltpu.MemorySpace.VMEM)
_SMEM_SCALAR = pl.BlockSpec(memory_space=pltpu.MemorySpace.SMEM)


# ----------------------------------------------------------------------------
# In-kernel building blocks
# ----------------------------------------------------------------------------
def _mlp_log_softmax(x, w1_ref, w2_ref, w3_ref, bias_ref):
    """Discriminator: Linear+ReLU -> Linear+ReLU -> Linear -> log_softmax(dim=1)."""
    num_classes = w3_ref.shape[1]
    b = bias_ref[...]                                    # (3, H); row 2 holds b3 (zero-padded)
    h = jnp.dot(x, w1_ref[...], preferred_element_type=jnp.float32) + b[0:1, :]
    h = jnp.maximum(h, 0.0)
    h = jnp.dot(h, w2_ref[...], preferred_element_type=jnp.float32) + b[1:2, :]
    h = jnp.maximum(h, 0.0)
    logits = (jnp.dot(h, w3_ref[...], preferred_element_type=jnp.float32)
              + b[2:3, :num_classes])
    m = jnp.max(logits, axis=-1, keepdims=True)
    shifted = logits - m
    lse = jnp.log(jnp.sum(jnp.exp(shifted), axis=-1, keepdims=True))
    return shifted - lse                                 # (B, C) log-probs


def _kld_batchmean_rowconst(lp, w):
    """KLDivLoss(reduction='batchmean') where every row of the target equals w (1, C)."""
    batch = lp.shape[0]
    safe_w = jnp.where(w > 0.0, w, 1.0)
    const = jnp.sum(jnp.where(w > 0.0, w * jnp.log(safe_w), 0.0))   # sum_c w*log(w)
    cross = jnp.sum(w * lp) / batch                                  # (1/B) sum_bc w_c*lp_bc
    return const - cross


# ----------------------------------------------------------------------------
# Fused kernels (one pallas_call per forward path)
# ----------------------------------------------------------------------------
def _disc_nll_kernel(x_ref, labels_ref, w1_ref, w2_ref, w3_ref, bias_ref, loss_ref):
    """Discriminator forward + nn.NLLLoss() (mean over batch), scalar out via SMEM."""
    lp = _mlp_log_softmax(x_ref[...], w1_ref, w2_ref, w3_ref, bias_ref)
    batch, num_classes = lp.shape
    class_iota = lax.broadcasted_iota(jnp.int32, (batch, num_classes), 1)
    picked = jnp.where(class_iota == labels_ref[...], lp, 0.0)       # one-hot gather
    loss_ref[0, 0] = -jnp.sum(picked) / batch


def _qa_adv_kernel(dom_lambda, quest_lambda,
                   x_ref,
                   wd1_ref, wd2_ref, wd3_ref, bd_ref,
                   wq1_ref, wq2_ref, wq3_ref, bq_ref,
                   dw_ref, qw_ref,
                   loss_ref):
    """Both discriminators + both KLD(batchmean) terms in one kernel, scalar via SMEM."""
    x = x_ref[...]
    lp_dom = _mlp_log_softmax(x, wd1_ref, wd2_ref, wd3_ref, bd_ref)
    lp_quest = _mlp_log_softmax(x, wq1_ref, wq2_ref, wq3_ref, bq_ref)
    kld_dom = _kld_batchmean_rowconst(lp_dom, dw_ref[...])
    kld_quest = _kld_batchmean_rowconst(lp_quest, qw_ref[...])
    loss_ref[0, 0] = dom_lambda * kld_dom - quest_lambda * kld_quest


# ----------------------------------------------------------------------------
# pallas_call wrappers
# ----------------------------------------------------------------------------
def discriminator_nll_loss(cls_embedding, labels, params):
    """'dom' / 'quest' branch: one fused kernel -> scalar NLL loss."""
    w1, w2, w3, bias = params
    labels2d = labels.astype(jnp.int32).reshape(-1, 1)
    out = pl.pallas_call(
        _disc_nll_kernel,
        out_shape=jax.ShapeDtypeStruct((1, 1), jnp.float32),
        in_specs=[_VMEM] * 6,
        out_specs=_SMEM_SCALAR,
    )(cls_embedding, labels2d, w1, w2, w3, bias)
    return out[0, 0]


def qa_adversarial_loss(cls_embedding, dom_params, quest_params,
                        dom_weights, quest_weights, dom_lambda, quest_lambda):
    """'qa' branch adversarial term: dom_lambda*KL_dom - quest_lambda*KL_quest."""
    kernel = functools.partial(_qa_adv_kernel, float(dom_lambda), float(quest_lambda))
    out = pl.pallas_call(
        kernel,
        out_shape=jax.ShapeDtypeStruct((1, 1), jnp.float32),
        in_specs=[_VMEM] * 11,
        out_specs=_SMEM_SCALAR,
    )(cls_embedding, *dom_params, *quest_params,
      dom_weights.reshape(1, -1), quest_weights.reshape(1, -1))
    return out[0, 0]


# ----------------------------------------------------------------------------
# Parameter construction (PyTorch-Linear-like uniform init; weights stored (in,out))
# ----------------------------------------------------------------------------
def _init_linear(key, fan_in, fan_out):
    kw, kb = jax.random.split(key)
    bound = 1.0 / jnp.sqrt(float(fan_in))
    w = jax.random.uniform(kw, (fan_in, fan_out), jnp.float32, -bound, bound)
    b = jax.random.uniform(kb, (fan_out,), jnp.float32, -bound, bound)
    return w, b


def init_discriminator(key, hidden_size, num_classes):
    assert num_classes <= hidden_size, "bias packing assumes num_classes <= hidden_size"
    k1, k2, k3 = jax.random.split(key, 3)
    w1, b1 = _init_linear(k1, hidden_size, hidden_size)
    w2, b2 = _init_linear(k2, hidden_size, hidden_size)
    w3, b3 = _init_linear(k3, hidden_size, num_classes)
    bias = jnp.zeros((3, hidden_size), jnp.float32)
    bias = bias.at[0, :].set(b1).at[1, :].set(b2).at[2, :num_classes].set(b3)
    return (w1, w2, w3, bias)


class AdvFriendlyQAPallas:
    """Pallas port of AdvFriendlyQA's discriminator / adversarial-loss compute."""

    def __init__(self, dom_weights, quest_weights, dom_classes, quest_classes,
                 hidden_size=32, dom_lambda=0.3, quest_lambda=0.3, seed=0):
        key = jax.random.PRNGKey(seed)
        kd, kq = jax.random.split(key)
        self.dom_params = init_discriminator(kd, hidden_size, dom_classes)
        self.quest_params = init_discriminator(kq, hidden_size, quest_classes)
        # NOTE: these are treated as probability-distribution rows for the KL target
        # (matches the PyTorch code); they should sum to 1 for a proper KL divergence.
        self.dom_weights = jnp.asarray(dom_weights, jnp.float32)
        self.quest_weights = jnp.asarray(quest_weights, jnp.float32)
        self.dom_lambda = dom_lambda
        self.quest_lambda = quest_lambda

    def forward(self, network, cls_embedding, labels=None, bert_loss=None):
        if network == "qa":
            adv = qa_adversarial_loss(cls_embedding, self.dom_params, self.quest_params,
                                      self.dom_weights, self.quest_weights,
                                      self.dom_lambda, self.quest_lambda)
            return bert_loss + adv
        elif network == "dom":
            return discriminator_nll_loss(cls_embedding, labels, self.dom_params)
        elif network == "quest":
            return discriminator_nll_loss(cls_embedding, labels, self.quest_params)
        else:
            raise ValueError(network)


# ----------------------------------------------------------------------------
if __name__ == "__main__":
    batch = 8
    hidden = 32          # stands in for DistilBERT hidden_size=768
    dom_classes = 4
    quest_classes = 4

    key = jax.random.PRNGKey(0)
    k_cls, k_dlab, k_qlab = jax.random.split(key, 3)

    # Stand-in for outputs.hidden_states[-1][:, 0, :] (CLS embedding)
    cls_embedding = jax.random.normal(k_cls, (batch, hidden), jnp.float32)
    dom_labels = jax.random.randint(k_dlab, (batch,), 0, dom_classes)
    quest_labels = jax.random.randint(k_qlab, (batch,), 0, quest_classes)
    bert_loss = jnp.float32(1.25)  # stand-in scalar for outputsQA.loss

    dom_weights = jnp.full((dom_classes,), 1.0 / dom_classes, jnp.float32)
    quest_weights = jnp.full((quest_classes,), 1.0 / quest_classes, jnp.float32)

    model = AdvFriendlyQAPallas(dom_weights, quest_weights,
                                dom_classes, quest_classes,
                                hidden_size=hidden)

    loss_dom = model.forward("dom", cls_embedding, labels=dom_labels)
    loss_quest = model.forward("quest", cls_embedding, labels=quest_labels)
    loss_qa = model.forward("qa", cls_embedding, bert_loss=bert_loss)

    jax.block_until_ready((loss_dom, loss_quest, loss_qa))
    print("KERNEL_OK")
</pallas_src>

<mosaic_0001>
module attributes {stable_mosaic.version = 11 : i64} {
  func.func @_disc_nll_kernel(%arg0: memref<8x32xf32, #tpu.memory_space<vmem>>, %arg1: memref<8x1xi32, #tpu.memory_space<vmem>>, %arg2: memref<32x32xf32, #tpu.memory_space<vmem>>, %arg3: memref<32x32xf32, #tpu.memory_space<vmem>>, %arg4: memref<32x4xf32, #tpu.memory_space<vmem>>, %arg5: memref<3x32xf32, #tpu.memory_space<vmem>>, %arg6: memref<1x1xf32, #tpu.memory_space<smem>>) attributes {dimension_semantics = [], scalar_prefetch = 0 : i64, scratch_operands = 0 : i64, tpu.core_type = #tpu.core_type<tc>} {
    %c0 = arith.constant 0 : index
    %c0_0 = arith.constant 0 : index
    %0 = vector.load %arg0[%c0, %c0_0] : memref<8x32xf32, #tpu.memory_space<vmem>>, vector<8x32xf32>
    %c0_1 = arith.constant 0 : index
    %c0_2 = arith.constant 0 : index
    %1 = vector.load %arg5[%c0_1, %c0_2] : memref<3x32xf32, #tpu.memory_space<vmem>>, vector<3x32xf32>
    %c0_3 = arith.constant 0 : index
    %c0_4 = arith.constant 0 : index
    %2 = vector.load %arg2[%c0_3, %c0_4] : memref<32x32xf32, #tpu.memory_space<vmem>>, vector<32x32xf32>
    %cst = arith.constant dense<0.000000e+00> : vector<8x32xf32>
    %3 = tpu.matmul %0, %2, %cst {dimension_numbers = #tpu.dot_dimension_numbers<[1], [0], [0], [1], [0, 0, 1, 1], [], []>} : vector<8x32xf32>, vector<32x32xf32>, vector<8x32xf32> -> vector<8x32xf32>
    %4 = vector.extract_strided_slice %1 {offsets = [0, 0], sizes = [1, 32], strides = [1, 1]} : vector<3x32xf32> to vector<1x32xf32>
    %5 = vector.broadcast %4 : vector<1x32xf32> to vector<8x32xf32>
    %6 = arith.addf %3, %5 : vector<8x32xf32>
    %cst_5 = arith.constant 0.000000e+00 : f32
    %7 = vector.broadcast %cst_5 : f32 to vector<8x32xf32>
    %8 = arith.maximumf %6, %7 : vector<8x32xf32>
    %c0_6 = arith.constant 0 : index
    %c0_7 = arith.constant 0 : index
    %9 = vector.load %arg3[%c0_6, %c0_7] : memref<32x32xf32, #tpu.memory_space<vmem>>, vector<32x32xf32>
    %cst_8 = arith.constant dense<0.000000e+00> : vector<8x32xf32>
    %10 = tpu.matmul %8, %9, %cst_8 {dimension_numbers = #tpu.dot_dimension_numbers<[1], [0], [0], [1], [0, 0, 1, 1], [], []>} : vector<8x32xf32>, vector<32x32xf32>, vector<8x32xf32> -> vector<8x32xf32>
    %11 = vector.extract_strided_slice %1 {offsets = [1, 0], sizes = [1, 32], strides = [1, 1]} : vector<3x32xf32> to vector<1x32xf32>
    %12 = vector.broadcast %11 : vector<1x32xf32> to vector<8x32xf32>
    %13 = arith.addf %10, %12 : vector<8x32xf32>
    %cst_9 = arith.constant 0.000000e+00 : f32
    %14 = vector.broadcast %cst_9 : f32 to vector<8x32xf32>
    %15 = arith.maximumf %13, %14 : vector<8x32xf32>
    %c0_10 = arith.constant 0 : index
    %c0_11 = arith.constant 0 : index
    %16 = vector.load %arg4[%c0_10, %c0_11] : memref<32x4xf32, #tpu.memory_space<vmem>>, vector<32x4xf32>
    %cst_12 = arith.constant dense<0.000000e+00> : vector<8x4xf32>
    %17 = tpu.matmul %15, %16, %cst_12 {dimension_numbers = #tpu.dot_dimension_numbers<[1], [0], [0], [1], [0, 0, 1, 1], [], []>} : vector<8x32xf32>, vector<32x4xf32>, vector<8x4xf32> -> vector<8x4xf32>
    %18 = vector.extract_strided_slice %1 {offsets = [2, 0], sizes = [1, 4], strides = [1, 1]} : vector<3x32xf32> to vector<1x4xf32>
    %19 = vector.broadcast %18 : vector<1x4xf32> to vector<8x4xf32>
    %20 = arith.addf %17, %19 : vector<8x4xf32>
    %cst_13 = arith.constant dense<0xFF800000> : vector<8xf32>
    %21 = vector.multi_reduction <maximumf>, %20, %cst_13 [1] : vector<8x4xf32> to vector<8xf32>
    %22 = vector.shape_cast %21 : vector<8xf32> to vector<8x1xf32>
    %23 = vector.broadcast %22 : vector<8x1xf32> to vector<8x4xf32>
    %24 = arith.subf %20, %23 : vector<8x4xf32>
    %25 = math.exp %24 : vector<8x4xf32>
    %cst_14 = arith.constant dense<0.000000e+00> : vector<8xf32>
    %26 = vector.multi_reduction <add>, %25, %cst_14 [1] : vector<8x4xf32> to vector<8xf32>
    %27 = vector.shape_cast %26 : vector<8xf32> to vector<8x1xf32>
    %28 = math.log %27 : vector<8x1xf32>
    %29 = vector.broadcast %28 : vector<8x1xf32> to vector<8x4xf32>
    %30 = arith.subf %24, %29 : vector<8x4xf32>
    %31 = tpu.iota {dimensions = array<i32: 1>} : vector<8x4xi32>
    %c0_15 = arith.constant 0 : index
    %c0_16 = arith.constant 0 : index
    %32 = vector.load %arg1[%c0_15, %c0_16] : memref<8x1xi32, #tpu.memory_space<vmem>>, vector<8x1xi32>
    %33 = vector.broadcast %32 : vector<8x1xi32> to vector<8x4xi32>
    %34 = arith.cmpi eq, %31, %33 : vector<8x4xi32>
    %cst_17 = arith.constant 0.000000e+00 : f32
    %35 = vector.broadcast %cst_17 : f32 to vector<8x4xf32>
    %36 = arith.select %34, %30, %35 : vector<8x4xi1>, vector<8x4xf32>
    %37 = vector.shape_cast %36 : vector<8x4xf32> to vector<1x8x4xf32>
    %cst_18 = arith.constant dense<0.000000e+00> : vector<1xf32>
    %38 = vector.multi_reduction <add>, %37, %cst_18 [1, 2] : vector<1x8x4xf32> to vector<1xf32>
    %39 = vector.shape_cast %38 : vector<1xf32> to vector<1x1x1xf32>
    %40 = vector.extract %39[0, 0, 0] : f32 from vector<1x1x1xf32>
    %cst_19 = arith.constant 0.000000e+00 : f32
    %41 = arith.subf %cst_19, %40 : f32
    %cst_20 = arith.constant 8.000000e+00 : f32
    %42 = arith.divf %41, %cst_20 : f32
    %c0_21 = arith.constant 0 : index
    %c0_22 = arith.constant 0 : index
    %43 = memref.load %arg6[%c0_21, %c0_22] : memref<1x1xf32, #tpu.memory_space<smem>>
    memref.store %42, %arg6[%c0_21, %c0_22] : memref<1x1xf32, #tpu.memory_space<smem>>
    return
  }
}

</mosaic_0001>

<llo_original>
// kernel: tpu_custom_call.1
$region0: #{tpu_custom_call.1}
  #allocation0 [shape = 'u32[]', space=smem, size = 0x4, offset = 0x4, fixed_abs, tag = 'smem constant byte address 0x4 - core index']
  #allocation1 [shape = 'u32[144,128]{1,0:T(1,128)}', space=vmem, size = 0x12000, scoped, tag = 'internal scratch']
  %s0 = inlined_call_operand.vmem [shape: f32[8,32], index: 0, kind: input, shape index: {}]
  %s1 = inlined_call_operand.vmem [shape: s32[8,1], index: 1, kind: input, shape index: {}]
  %s2 = inlined_call_operand.vmem [shape: f32[32,32], index: 2, kind: input, shape index: {}]
  %s3 = inlined_call_operand.hbm [shape: f32[32,32], index: 3, kind: input, shape index: {}]
  %s4 = inlined_call_operand.vmem [shape: f32[32,4], index: 4, kind: input, shape index: {}]
  %s5 = inlined_call_operand.vmem [shape: f32[3,32], index: 5, kind: input, shape index: {}]
  %s6 = inlined_call_operand.hbm [shape: f32[1,1], index: 6, kind: output, shape index: {}]
  %s7 = sld [smem:[#allocation0]]
  $region38: #{tpu_custom_call.1} parent=0
    _
  %s9 = ssub.s32 1, %s7
  %s10 = scalar_select 0, %s9, %s7
  $region1: #{tpu_custom_call.1} parent=0
    #allocation2 [shape = 'u8[16384]{0}', space=vmem, size = 0x4000, scoped, tag = 'input window, operand 3, single buffered']
    #allocation3 [shape = 's32[1]{0}', space=sflag, size = 0x4, scoped, tag = 'scoped memory for tpu_custom_call.1']
    #allocation4 [shape = 's32[1]{0}', space=sflag, size = 0x4, scoped, tag = 'scoped memory for tpu_custom_call.1']
    #allocation5 [shape = 'u8[512]{0}', space=smem, size = 0x200, scoped, tag = 'output window, operand 0, single buffered']
    %11 = vsyncpa [#allocation3], 0
    %12 = vsyncpa [#allocation4], 0
    // Predicated region
    $region2: #{tpu_custom_call.1} parent=1 // pred_check
      _
    $region3: #{tpu_custom_call.1} parent=1 // pred_check_branch
      %14 = sbr.rel (0) target = $region5
    $region4: #{tpu_custom_call.1} parent=1 // pred_region
      _
    $region5: #{tpu_custom_call.1} parent=1 // pred_fallthru
      _
    // Predicated region
    $region6: #{tpu_custom_call.1} parent=1 // pred_check
      _
    $region7: #{tpu_custom_call.1} parent=1 // pred_check_branch
      %16 = sbr.rel (0) target = $region9
    $region8: #{tpu_custom_call.1} parent=1 // pred_region
      _
    $region9: #{tpu_custom_call.1} parent=1 // pred_fallthru
      _
    // Predicated region
    $region10: #{tpu_custom_call.1} parent=1 // pred_check
      _
    $region11: #{tpu_custom_call.1} parent=1 // pred_check_branch
      %18 = sbr.rel (0) target = $region13
    $region12: #{tpu_custom_call.1} parent=1 // pred_region
      _
    $region13: #{tpu_custom_call.1} parent=1 // pred_fallthru
      _
    // Predicated region
    $region14: #{tpu_custom_call.1} parent=1 // pred_check
      _
    $region15: #{tpu_custom_call.1} parent=1 // pred_check_branch
      %20 = sbr.rel (0) target = $region17
    $region16: #{tpu_custom_call.1} parent=1 // pred_region
      %s22 = ssub.s32 512, 512
      %23 = vsyncadd [#allocation3], %s22
      %s24 = sshll.u32 [#allocation2], 4
      %s25 = int_to_ptr.vmem [resolvable:$true] %s24
      %30 = dma.hbm_to_vmem [thread:$0]  %s3, 512, %s25, [#allocation3], 128, 128, 8
    $region17: #{tpu_custom_call.1} parent=1 // pred_fallthru
      _
    // Predicated region
    $region18: #{tpu_custom_call.1} parent=1 // pred_check
      _
    $region19: #{tpu_custom_call.1} parent=1 // pred_check_branch
      %32 = sbr.rel (0) target = $region21
    $region20: #{tpu_custom_call.1} parent=1 // pred_region
      _
    $region21: #{tpu_custom_call.1} parent=1 // pred_fallthru
      _
    // Predicated region
    $region22: #{tpu_custom_call.1} parent=1 // pred_check
      _
    $region23: #{tpu_custom_call.1} parent=1 // pred_check_branch
      %34 = sbr.rel (0) target = $region25
    $region24: #{tpu_custom_call.1} parent=1 // pred_region
      _
    $region25: #{tpu_custom_call.1} parent=1 // pred_fallthru
      _
    // Predicated region
    $region26: #{tpu_custom_call.1} parent=1 // pred_check
      _
    $region27: #{tpu_custom_call.1} parent=1 // pred_check_branch
      %36 = sbr.rel (0) target = $region29
    $region28: #{tpu_custom_call.1} parent=1 // pred_region
      %37 = dma.done [#allocation3], 512
    $region29: #{tpu_custom_call.1} parent=1 // pred_fallthru
      _
    %v38 = vld [vmem:[%s0] sm:$0xff]
    %v39 = vld [vmem:[%s5] sm:$0x7]
    %v40 = vld [vmem:[%s2] sm:$0xff]
    %v41 = vld [vmem:[%s2 + $0x8] sm:$0xff]
    %v42 = vld [vmem:[%s2 + $0x10] sm:$0xff]
    %v43 = vld [vmem:[%s2 + $0x18] sm:$0xff]
    %v44 = vlaneseq
    %v45 = vshrl.u32 %v44, 7
    %v46 = vsub.s32 0, %v45
    %v47 = vrot.slane %v39, %v46
    %vm48 = vcmask 261120
    %v50 = vsel %vm48, %v38, 0
    %52 = vmatprep.subr.mxu0 0.0
    %53 = vmatpush1.msra.mxu0 %v40
    %54 = vmatprep.subr.mxu0 0.0
    %55 = vmatpush1.msra.mxu0 %v41
    %56 = vmatprep.subr.mxu0 0.0
    %57 = vmatpush1.msra.mxu0 %v42
    %58 = vmatprep.subr.mxu0 0.0
    %59 = vmatpush1.msra.mxu0 %v43
    %60 = vmatprep.subr.mxu0 0.0
    %61 = vmatpush1.msra.mxu0 0.0
    %62 = vmatprep.subr.mxu0 0.0
    %63 = vmatpush1.msra.mxu0 0.0
    %64 = vmatprep.subr.mxu0 0.0
    %65 = vmatpush1.msra.mxu0 0.0
    %66 = vmatprep.subr.mxu0 0.0
    %67 = vmatpush1.msra.mxu0 0.0
    %68 = vmatprep.subr.mxu0 0.0
    %69 = vmatpush1.msra.mxu0 0.0
    %70 = vmatprep.subr.mxu0 0.0
    %71 = vmatpush1.msra.mxu0 0.0
    %72 = vmatprep.subr.mxu0 0.0
    %73 = vmatpush1.msra.mxu0 0.0
    %74 = vmatprep.subr.mxu0 0.0
    %75 = vmatpush1.msra.mxu0 0.0
    %76 = vmatprep.subr.mxu0 0.0
    %77 = vmatpush1.msra.mxu0 0.0
    %78 = vmatprep.subr.mxu0 0.0
    %79 = vmatpush1.msra.mxu0 0.0
    %80 = vmatprep.subr.mxu0 0.0
    %81 = vmatpush1.msra.mxu0 0.0
    %82 = vmatprep.subr.mxu0 0.0
    %83 = vmatpush1.msra.mxu0 0.0
    %84 = vmatprep.subr.mxu0 0.0
    %85 = vmatpush1.msra.mxu0 0.0
    %86 = vmatprep.subr.mxu0 0.0
    %87 = vmatpush1.msra.mxu0 0.0
    %88 = vmatprep.subr.mxu0 0.0
    %89 = vmatpush1.msra.mxu0 0.0
    %90 = vmatprep.subr.mxu0 0.0
    %91 = vmatpush1.msra.mxu0 0.0
    %92 = vmatprep.subr.mxu0 0.0
    %93 = vmatpush1.msra.mxu0 0.0
    %94 = vmatprep.subr.mxu0 0.0
    %95 = vmatpush1.msra.mxu0 0.0
    %96 = vmatprep.subr.mxu0 0.0
    %97 = vmatpush1.msra.mxu0 0.0
    %98 = vmatprep.subr.mxu0 0.0
    %99 = vmatpush1.msra.mxu0 0.0
    %100 = vmatprep.subr.mxu0 0.0
    %101 = vmatpush1.msra.mxu0 0.0
    %102 = vmatprep.subr.mxu0 0.0
    %103 = vmatpush1.msra.mxu0 0.0
    %104 = vmatprep.subr.mxu0 0.0
    %105 = vmatpush1.msra.mxu0 0.0
    %106 = vmatprep.subr.mxu0 0.0
    %107 = vmatpush1.msra.mxu0 0.0
    %108 = vmatprep.subr.mxu0 0.0
    %109 = vmatpush1.msra.mxu0 0.0
    %110 = vmatprep.subr.mxu0 0.0
    %111 = vmatpush1.msra.mxu0 0.0
    %112 = vmatprep.subr.mxu0 0.0
    %113 = vmatpush1.msra.mxu0 0.0
    %114 = vmatprep.subr.mxu0 0.0
    %115 = vmatpush1.msra.mxu0 0.0
    %116 = vmatprep.mubr.f32.mxu0 0.0
    %117 = vmatmul.mubr.f32.gmra.mrb[0].mxu0 %v50
    %v118 = vpop.f32.mrb[0].mxu0
    %v119 = vadd.f32 %v47, %v118
    %v120 = vpop.f32.mrb[0].mxu0
    %121 = vdwg.mxu0
    %v122 = vmax.f32 %v119, 0.0
    %v123 = vld [vmem:[#allocation2] sm:$0xff]
    %v124 = vld [vmem:[#allocation2 + $0x8] sm:$0xff]
    %v125 = vld [vmem:[#allocation2 + $0x10] sm:$0xff]
    %v126 = vld [vmem:[#allocation2 + $0x18] sm:$0xff]
    %v127 = vlaneseq
    %v128 = vshrl.u32 %v127, 7
    %v129 = vsub.s32 1, %v128
    %v130 = vrot.slane %v39, %v129
    %v132 = vsel %vm48, %v122, 0
    %134 = vmatprep.subr.mxu0 0.0
    %135 = vmatpush1.msra.mxu0 %v123
    %136 = vmatprep.subr.mxu0 0.0
    %137 = vmatpush1.msra.mxu0 %v124
    %138 = vmatprep.subr.mxu0 0.0
    %139 = vmatpush1.msra.mxu0 %v125
    %140 = vmatprep.subr.mxu0 0.0
    %141 = vmatpush1.msra.mxu0 %v126
    %142 = vmatprep.subr.mxu0 0.0
    %143 = vmatpush1.msra.mxu0 0.0
    %144 = vmatprep.subr.mxu0 0.0
    %145 = vmatpush1.msra.mxu0 0.0
    %146 = vmatprep.subr.mxu0 0.0
    %147 = vmatpush1.msra.mxu0 0.0
    %148 = vmatprep.subr.mxu0 0.0
    %149 = vmatpush1.msra.mxu0 0.0
    %150 = vmatprep.subr.mxu0 0.0
    %151 = vmatpush1.msra.mxu0 0.0
    %152 = vmatprep.subr.mxu0 0.0
    %153 = vmatpush1.msra.mxu0 0.0
    %154 = vmatprep.subr.mxu0 0.0
    %155 = vmatpush1.msra.mxu0 0.0
    %156 = vmatprep.subr.mxu0 0.0
    %157 = vmatpush1.msra.mxu0 0.0
    %158 = vmatprep.subr.mxu0 0.0
    %159 = vmatpush1.msra.mxu0 0.0
    %160 = vmatprep.subr.mxu0 0.0
    %161 = vmatpush1.msra.mxu0 0.0
    %162 = vmatprep.subr.mxu0 0.0
    %163 = vmatpush1.msra.mxu0 0.0
    %164 = vmatprep.subr.mxu0 0.0
    %165 = vmatpush1.msra.mxu0 0.0
    %166 = vmatprep.subr.mxu0 0.0
    %167 = vmatpush1.msra.mxu0 0.0
    %168 = vmatprep.subr.mxu0 0.0
    %169 = vmatpush1.msra.mxu0 0.0
    %170 = vmatprep.subr.mxu0 0.0
    %171 = vmatpush1.msra.mxu0 0.0
    %172 = vmatprep.subr.mxu0 0.0
    %173 = vmatpush1.msra.mxu0 0.0
    %174 = vmatprep.subr.mxu0 0.0
    %175 = vmatpush1.msra.mxu0 0.0
    %176 = vmatprep.subr.mxu0 0.0
    %177 = vmatpush1.msra.mxu0 0.0
    %178 = vmatprep.subr.mxu0 0.0
    %179 = vmatpush1.msra.mxu0 0.0
    %180 = vmatprep.subr.mxu0 0.0
    %181 = vmatpush1.msra.mxu0 0.0
    %182 = vmatprep.subr.mxu0 0.0
    %183 = vmatpush1.msra.mxu0 0.0
    %184 = vmatprep.subr.mxu0 0.0
    %185 = vmatpush1.msra.mxu0 0.0
    %186 = vmatprep.subr.mxu0 0.0
    %187 = vmatpush1.msra.mxu0 0.0
    %188 = vmatprep.subr.mxu0 0.0
    %189 = vmatpush1.msra.mxu0 0.0
    %190 = vmatprep.subr.mxu0 0.0
    %191 = vmatpush1.msra.mxu0 0.0
    %192 = vmatprep.subr.mxu0 0.0
    %193 = vmatpush1.msra.mxu0 0.0
    %194 = vmatprep.subr.mxu0 0.0
    %195 = vmatpush1.msra.mxu0 0.0
    %196 = vmatprep.subr.mxu0 0.0
    %197 = vmatpush1.msra.mxu0 0.0
    %198 = vmatprep.mubr.f32.mxu0 0.0
    %199 = vmatmul.mubr.f32.gmra.mrb[0].mxu0 %v132
    %v200 = vpop.f32.mrb[0].mxu0
    %v201 = vadd.f32 %v130, %v200
    %v202 = vpop.f32.mrb[0].mxu0
    %203 = vdwg.mxu0
    %v204 = vmax.f32 %v201, 0.0
    %v205 = vld [vmem:[%s4] sm:$0xff]
    %v206 = vld [vmem:[%s4 + $0x8] sm:$0xff]
    %v207 = vld [vmem:[%s4 + $0x10] sm:$0xff]
    %v208 = vld [vmem:[%s4 + $0x18] sm:$0xff]
    %v209 = vlaneseq
    %v210 = vshrl.u32 %v209, 7
    %v211 = vsub.s32 2, %v210
    %v212 = vrot.slane %v39, %v211
    %v214 = vsel %vm48, %v204, 0
    %216 = vmatprep.subr.mxu0 0.0
    %217 = vmatpush1.msra.mxu0 %v205
    %218 = vmatprep.subr.mxu0 0.0
    %219 = vmatpush1.msra.mxu0 %v206
    %220 = vmatprep.subr.mxu0 0.0
    %221 = vmatpush1.msra.mxu0 %v207
    %222 = vmatprep.subr.mxu0 0.0
    %223 = vmatpush1.msra.mxu0 %v208
    %224 = vmatprep.subr.mxu0 0.0
    %225 = vmatpush1.msra.mxu0 0.0
    %226 = vmatprep.subr.mxu0 0.0
    %227 = vmatpush1.msra.mxu0 0.0
    %228 = vmatprep.subr.mxu0 0.0
    %229 = vmatpush1.msra.mxu0 0.0
    %230 = vmatprep.subr.mxu0 0.0
    %231 = vmatpush1.msra.mxu0 0.0
    %232 = vmatprep.subr.mxu0 0.0
    %233 = vmatpush1.msra.mxu0 0.0
    %234 = vmatprep.subr.mxu0 0.0
    %235 = vmatpush1.msra.mxu0 0.0
    %236 = vmatprep.subr.mxu0 0.0
    %237 = vmatpush1.msra.mxu0 0.0
    %238 = vmatprep.subr.mxu0 0.0
    %239 = vmatpush1.msra.mxu0 0.0
    %240 = vmatprep.subr.mxu0 0.0
    %241 = vmatpush1.msra.mxu0 0.0
    %242 = vmatprep.subr.mxu0 0.0
    %243 = vmatpush1.msra.mxu0 0.0
    %244 = vmatprep.subr.mxu0 0.0
    %245 = vmatpush1.msra.mxu0 0.0
    %246 = vmatprep.subr.mxu0 0.0
    %247 = vmatpush1.msra.mxu0 0.0
    %248 = vmatprep.subr.mxu0 0.0
    %249 = vmatpush1.msra.mxu0 0.0
    %250 = vmatprep.subr.mxu0 0.0
    %251 = vmatpush1.msra.mxu0 0.0
    %252 = vmatprep.subr.mxu0 0.0
    %253 = vmatpush1.msra.mxu0 0.0
    %254 = vmatprep.subr.mxu0 0.0
    %255 = vmatpush1.msra.mxu0 0.0
    %256 = vmatprep.subr.mxu0 0.0
    %257 = vmatpush1.msra.mxu0 0.0
    %258 = vmatprep.subr.mxu0 0.0
    %259 = vmatpush1.msra.mxu0 0.0
    %260 = vmatprep.subr.mxu0 0.0
    %261 = vmatpush1.msra.mxu0 0.0
    %262 = vmatprep.subr.mxu0 0.0
    %263 = vmatpush1.msra.mxu0 0.0
    %264 = vmatprep.subr.mxu0 0.0
    %265 = vmatpush1.msra.mxu0 0.0
    %266 = vmatprep.subr.mxu0 0.0
    %267 = vmatpush1.msra.mxu0 0.0
    %268 = vmatprep.subr.mxu0 0.0
    %269 = vmatpush1.msra.mxu0 0.0
    %270 = vmatprep.subr.mxu0 0.0
    %271 = vmatpush1.msra.mxu0 0.0
    %272 = vmatprep.subr.mxu0 0.0
    %273 = vmatpush1.msra.mxu0 0.0
    %274 = vmatprep.subr.mxu0 0.0
    %275 = vmatpush1.msra.mxu0 0.0
    %276 = vmatprep.subr.mxu0 0.0
    %277 = vmatpush1.msra.mxu0 0.0
    %278 = vmatprep.subr.mxu0 0.0
    %279 = vmatpush1.msra.mxu0 0.0
    %280 = vmatprep.mubr.f32.mxu0 0.0
    %281 = vmatmul.mubr.f32.gmra.mrb[0].mxu0 %v214
    %v282 = vpop.f32.mrb[0].mxu0
    %v283 = vadd.f32 %v212, %v282
    %v284 = vpop.f32.mrb[0].mxu0
    %285 = vdwg.mxu0
    %vm286 = vcmask 31744
    %v287 = vsel %vm286, %v283, -inf
    %288 = vmax.xlane.f32.xlu0 %v287
    %v289 = vpop.xlane.xlu0 %288
    %v290 = vsub.f32 %v283, %v289
    %v291 = vmul.f32 %v290, 1.442695
    %v292 = vpow.pop %v291
    %v293 = vsel %vm286, %v292, 0.0
    %294 = vadd.xlane.f32.xlu0 %v293
    %v295 = vpop.xlane.xlu0 %294
    %v296 = vlog2.pop %v295
    %v297 = vmul.f32 %v296, 0.6931472
    %v298 = vsub.f32 %v290, %v297
    %v299 = vlaneseq
    %v300 = vand.u32 %v299, 127
    %v301 = vld [vmem:[%s1] sm:$0xff]
    %302 = vset.pattern.permute.xlu0 0
    %303 = vperm.xlu0 %302, %v301
    %v304 = vpop.permute.xlu0 %303
    %vm305 = vcmp.eq.s32.totalorder %v300, %v304
    %v306 = vsel %vm305, %v298, 0.0
    %v307 = vsel %vm286, %v306, 0.0
    %308 = vadd.xlane.f32.xlu0 %v307
    %v309 = vpop.xlane.xlu0 %308
    %v310 = vrot.slane %v309, 4
    %v311 = vadd.f32 %v309, %v310
    %v312 = vrot.slane %v311, 2
    %v313 = vadd.f32 %v311, %v312
    %v314 = vrot.slane %v313, 1
    %v315 = vadd.f32 %v313, %v314
    %s316 = vtos %v315
    %s317 = ssub.f32 0.0, %s316
    %v318 = vrcp.pop 8.0
    %s319 = vtos %v318
    %s320 = smul.f32 %s317, %s319
    %s321 = scalar_lea.smem [#allocation5], 0
    %322 = sst [smem:[%s321]] %s320
    // Predicated region
    $region30: #{tpu_custom_call.1} parent=1 // pred_check
      _
    $region31: #{tpu_custom_call.1} parent=1 // pred_check_branch
      %324 = sbr.rel (0) target = $region33
    $region32: #{tpu_custom_call.1} parent=1 // pred_region
      %s326 = ssub.s32 16, 16
      %327 = vsyncadd [#allocation4], %s326
      %330 = dma.smem_to_hbm [#allocation5], 16, %s6, [#allocation4]
    $region33: #{tpu_custom_call.1} parent=1 // pred_fallthru
      _
    // Predicated region
    $region34: #{tpu_custom_call.1} parent=1 // pred_check
      _
    $region35: #{tpu_custom_call.1} parent=1 // pred_check_branch
      %332 = sbr.rel (0) target = $region37
    $region36: #{tpu_custom_call.1} parent=1 // pred_region
      %333 = dma.done [#allocation4], 16
    $region37: #{tpu_custom_call.1} parent=1 // pred_fallthru
      _
    %334 = sfence
    %335 = vsyncpa [#allocation3], 1
    %336 = vsyncpa [#allocation4], 1

</llo_original>
